<compile_context>
chip_gen: v5e
topology: v5e:2x2
jax: 0.10.0
libtpu: 0.0.40
codegen_flags: <defaults>
</compile_context>

<pallas_src>
import functools

import jax
import jax.numpy as jnp
import numpy as np
from jax.experimental import pallas as pl
from jax.experimental.pallas import tpu as pltpu

ALPHA = 8.3   # depth-similarity sharpness exp(-ALPHA*|dp-dq|), as in Depth-aware CNN
K = 3         # kernel_size=3, stride=1, padding=1, dilation=1
BN_EPS = 1e-5


def _depthconv_bn_relu_kernel(x_ref, d_ref, w_ref, shift_ref, o_ref, col_ref,
                              *, H, W, alpha, mm_dtype):
    # x_ref     : (bt, Cin_p, L)       height-padded, row-flattened input (L=(H+2)*W+2)
    # d_ref     : (bt, 1, L)           height-padded, row-flattened upsampled depth
    # w_ref     : (Cout, K*K*Cin_p)    BN-scale-folded weights (tap-major, channel-minor)
    # shift_ref : (Cout, 1)            folded conv-bias + BatchNorm shift
    # o_ref     : (bt, Cout, H*W)      lane-dense output
    # col_ref   : (K*K*Cin_p, bt*H*W)  VMEM scratch: depth-weighted im2col block
    bt = x_ref.shape[0]
    cin_p = x_ref.shape[1]
    HW = H * W

    # Lane masks that zero taps falling outside the image width.  The row-flattened
    # layout wraps across rows there; zero-padding semantics require 0 contribution,
    # which matches the reference (x is zero-padded at those positions).
    col_idx = jax.lax.broadcasted_iota(jnp.int32, (1, HW), 1) % W
    edge_mask = (
        (col_idx != 0).astype(jnp.float32),        # kj=0 reads x-1: invalid at x == 0
        jnp.ones((1, HW), jnp.float32),            # kj=1 always valid
        (col_idx != (W - 1)).astype(jnp.float32),  # kj=2 reads x+1: invalid at x == W-1
    )

    for bi in range(bt):
        x_b = x_ref[bi]                            # (Cin_p, L)
        d_b = d_ref[bi]                            # (1, L)
        d_c = d_b[:, W + 1:W + 1 + HW]             # depth at output (center) positions
        for ki in range(K):
            for kj in range(K):
                start = ki * W + kj                # flat offset of this tap's window
                ds = d_b[:, start:start + HW]
                xs = x_b[:, start:start + HW]
                wd = jnp.exp(-alpha * jnp.abs(d_c - ds)) * edge_mask[kj]   # (1, HW)
                t = ki * K + kj
                col_ref[t * cin_p:(t + 1) * cin_p, bi * HW:(bi + 1) * HW] = (
                    (xs * wd).astype(mm_dtype))

    # One fused MXU matmul for all taps / channels / batch elements of this step.
    acc = jnp.dot(w_ref[...], col_ref[...], preferred_element_type=jnp.float32)
    y = jnp.maximum(acc + shift_ref[...], 0.0)     # folded BN shift + ReLU
    for bi in range(bt):
        o_ref[bi] = y[:, bi * HW:(bi + 1) * HW]    # lane-dense (H*W multiple of 128) store


def _pick_batch_tile(B, per_batch_bytes, budget_bytes=4 << 20):
    for cand in range(B, 0, -1):
        if B % cand == 0 and cand * per_batch_bytes <= budget_bytes:
            return cand
    return 1


def depth_conv_module_forward(x_nchw, depth, params, *, use_bf16_matmul=False):
    """x_nchw: (B, Cin, H, W) f32; depth: (B, Hd, Wd) f32. Returns (B, Cout, H, W)."""
    B, Cin, H, W = x_nchw.shape
    w = params["weight"].astype(jnp.float32)       # (Cout, Cin, K, K) OIHW
    bias = params["bias"].astype(jnp.float32)
    gamma = params["bn_gamma"].astype(jnp.float32)
    beta = params["bn_beta"].astype(jnp.float32)
    mean = params["bn_mean"].astype(jnp.float32)
    var = params["bn_var"].astype(jnp.float32)
    Cout = w.shape[0]

    # F.upsample(mode='bilinear') -> align_corners=False (modern PyTorch default);
    # jax.image.resize 'bilinear' uses half-pixel centers, which matches.
    # TODO(synk): very old PyTorch F.upsample defaulted to align_corners=True; switch
    # the resize if the original checkpoint expects that behaviour.
    d = jax.image.resize(depth[:, None, :, :].astype(jnp.float32),
                         (B, 1, H, W), method="bilinear")[:, 0]

    cin_p = ((Cin + 7) // 8) * 8                   # pad channels to a sublane multiple
    HW = H * W
    L = (H + 2) * W + 2                            # flat length: 1 halo row top/bottom + 1 elem each end

    # Channels-first (no NHWC transposes).  Height-pad by one zero row, flatten rows
    # onto the lane axis, add one flat element front/back so every 3x3 tap window is
    # a static lane slice of length H*W.
    x_hp = jnp.pad(x_nchw.astype(jnp.float32),
                   ((0, 0), (0, cin_p - Cin), (1, 1), (0, 0)))
    x_flat = jnp.pad(x_hp.reshape(B, cin_p, (H + 2) * W), ((0, 0), (0, 0), (1, 1)))
    d_hp = jnp.pad(d, ((0, 0), (1, 1), (0, 0)))
    d_flat = jnp.pad(d_hp.reshape(B, 1, (H + 2) * W), ((0, 0), (0, 0), (1, 1)))

    # Fold conv bias + BatchNorm (inference mode, running stats) into weight scale/shift.
    # TODO(synk): training-mode batch statistics are not reproduced.
    inv_std = 1.0 / jnp.sqrt(var + BN_EPS)
    scale = gamma * inv_std                                    # (Cout,)
    shift = ((bias - mean) * scale + beta)[:, None]            # (Cout, 1)
    w_p = jnp.pad(w, ((0, 0), (0, cin_p - Cin), (0, 0), (0, 0)))          # (Cout, Cin_p, K, K)
    w2 = jnp.transpose(w_p, (0, 2, 3, 1)).reshape(Cout, K * K * cin_p)    # tap-major rows
    w2 = w2 * scale[:, None]

    # bf16 MXU operands (mainly a v5e win); f32 accumulation either way.
    mm_dtype = jnp.bfloat16 if use_bf16_matmul else jnp.float32
    w2 = w2.astype(mm_dtype)

    kkc = K * K * cin_p
    per_batch_bytes = 4 * (cin_p * L + L + kkc * HW + Cout * HW) * 2      # ~double-buffered
    bt = _pick_batch_tile(B, per_batch_bytes)

    kernel = functools.partial(_depthconv_bn_relu_kernel,
                               H=H, W=W, alpha=ALPHA, mm_dtype=mm_dtype)

    out = pl.pallas_call(
        kernel,
        out_shape=jax.ShapeDtypeStruct((B, Cout, HW), jnp.float32),
        grid_spec=pltpu.PrefetchScalarGridSpec(
            num_scalar_prefetch=0,
            grid=(B // bt,),
            in_specs=[
                pl.BlockSpec((bt, cin_p, L), lambda g: (g, 0, 0)),
                pl.BlockSpec((bt, 1, L), lambda g: (g, 0, 0)),
                pl.BlockSpec((Cout, kkc), lambda g: (0, 0)),
                pl.BlockSpec((Cout, 1), lambda g: (0, 0)),
            ],
            out_specs=pl.BlockSpec((bt, Cout, HW), lambda g: (g, 0, 0)),
            scratch_shapes=[pltpu.VMEM((kkc, bt * HW), mm_dtype)],
        ),
        # TODO(synk): at production H*W add a second, 'parallel' row-strip grid axis and
        # cap vmem_limit_bytes so double-buffered strips respect v7x's 64 MiB VMEM.
        compiler_params=pltpu.CompilerParams(dimension_semantics=("parallel",)),
    )(x_flat, d_flat, w2, shift)

    # (B, Cout, H*W) -> (B, Cout, H, W): metadata-only row-major reshape, no transpose.
    return out.reshape(B, Cout, H, W)


def ref_forward(x_nchw, depth, params):
    """Pure-JAX reference with identical math, for verification."""
    B, Cin, H, W = x_nchw.shape
    w = params["weight"]
    bias = params["bias"]
    gamma, beta = params["bn_gamma"], params["bn_beta"]
    mean, var = params["bn_mean"], params["bn_var"]
    Cout = w.shape[0]

    d = jax.image.resize(depth[:, None, :, :], (B, 1, H, W), method="bilinear")[:, 0]
    xp = jnp.pad(x_nchw, ((0, 0), (0, 0), (1, 1), (1, 1)))
    dp = jnp.pad(d, ((0, 0), (1, 1), (1, 1)))

    out = jnp.zeros((B, Cout, H, W), jnp.float32)
    for ki in range(K):
        for kj in range(K):
            xs = xp[:, :, ki:ki + H, kj:kj + W]
            ds = dp[:, ki:ki + H, kj:kj + W]
            wd = jnp.exp(-ALPHA * jnp.abs(d - ds))[:, None]
            out = out + jnp.einsum("bihw,oi->bohw", xs * wd, w[:, :, ki, kj])
    out = out + bias[None, :, None, None]
    out = (out - mean[None, :, None, None]) / jnp.sqrt(var[None, :, None, None] + BN_EPS)
    out = out * gamma[None, :, None, None] + beta[None, :, None, None]
    return jnp.maximum(out, 0.0)


if __name__ == "__main__":
    B, Cin, Cout, H, W = 2, 4, 8, 16, 16
    Hd, Wd = 8, 8

    key = jax.random.PRNGKey(0)
    ks = jax.random.split(key, 8)
    x = jax.random.normal(ks[0], (B, Cin, H, W), jnp.float32)
    depth = jax.random.uniform(ks[1], (B, Hd, Wd), jnp.float32, minval=0.0, maxval=1.0)

    params = {
        "weight": 0.1 * jax.random.normal(ks[2], (Cout, Cin, K, K), jnp.float32),
        "bias": 0.05 * jax.random.normal(ks[3], (Cout,), jnp.float32),
        "bn_gamma": 1.0 + 0.1 * jax.random.normal(ks[4], (Cout,), jnp.float32),
        "bn_beta": 0.1 * jax.random.normal(ks[5], (Cout,), jnp.float32),
        "bn_mean": 0.1 * jax.random.normal(ks[6], (Cout,), jnp.float32),
        "bn_var": jax.random.uniform(ks[7], (Cout,), jnp.float32, minval=0.5, maxval=1.5),
    }

    out = depth_conv_module_forward(x, depth, params)   # f32 MXU path (set use_bf16_matmul=True on v5e)
    jax.block_until_ready(out)

    ref = ref_forward(x, depth, params)
    assert out.shape == (B, Cout, H, W)
    assert np.allclose(np.asarray(out), np.asarray(ref), atol=1e-4, rtol=1e-4), (
        "Pallas kernel does not match reference"
    )
    print("KERNEL_OK")
</pallas_src>

<mosaic_0001>
module attributes {stable_mosaic.version = 11 : i64} {
  func.func @_depthconv_bn_relu_kernel(%arg0: i32, %arg1: memref<2x8x290xf32, #tpu.memory_space<vmem>>, %arg2: memref<2x1x290xf32, #tpu.memory_space<vmem>>, %arg3: memref<8x72xf32, #tpu.memory_space<vmem>>, %arg4: memref<8x1xf32, #tpu.memory_space<vmem>>, %arg5: memref<2x8x256xf32, #tpu.memory_space<vmem>>, %arg6: memref<72x512xf32, #tpu.memory_space<vmem>>) attributes {dimension_semantics = [#tpu.dimension_semantics<parallel>], iteration_bounds = array<i64: 1>, scalar_prefetch = 0 : i64, scratch_operands = 1 : i64, tpu.core_type = #tpu.core_type<tc>, window_params = [{transform_indices = @transform_0, window_bounds = array<i64: 2, 8, 290>}, {transform_indices = @transform_1, window_bounds = array<i64: 2, 1, 290>}, {pipeline_mode = #tpu.pipeline_mode<synchronous>, transform_indices = @transform_2, window_bounds = array<i64: 8, 72>}, {pipeline_mode = #tpu.pipeline_mode<synchronous>, transform_indices = @transform_3, window_bounds = array<i64: 8, 1>}, {transform_indices = @transform_4, window_bounds = array<i64: 2, 8, 256>}]} {
    %0 = tpu.iota {dimensions = array<i32: 1>} : vector<1x256xi32>
    %c16_i32 = arith.constant 16 : i32
    %c0_i32 = arith.constant 0 : i32
    %1 = arith.cmpi eq, %c16_i32, %c0_i32 : i32
    %c1_i32 = arith.constant 1 : i32
    %2 = arith.select %1, %c1_i32, %c16_i32 : i32
    %3 = vector.broadcast %2 : i32 to vector<1x256xi32>
    %4 = arith.remsi %0, %3 : vector<1x256xi32>
    %c0_i32_0 = arith.constant 0 : i32
    %5 = vector.broadcast %c0_i32_0 : i32 to vector<1x256xi32>
    %6 = arith.cmpi ne, %4, %5 : vector<1x256xi32>
    %c0_i32_1 = arith.constant 0 : i32
    %7 = vector.broadcast %c0_i32_1 : i32 to vector<1x256xi32>
    %8 = arith.cmpi slt, %4, %7 : vector<1x256xi32>
    %c0_i32_2 = arith.constant 0 : i32
    %9 = arith.cmpi slt, %2, %c0_i32_2 : i32
    %10 = vector.broadcast %9 : i1 to vector<1x256xi1>
    %11 = vector.broadcast %10 : vector<1x256xi1> to vector<1x256xi1>
    %12 = arith.xori %8, %11 : vector<1x256xi1>
    %13 = arith.andi %12, %6 : vector<1x256xi1>
    %14 = vector.broadcast %2 : i32 to vector<1x256xi32>
    %15 = arith.addi %4, %14 : vector<1x256xi32>
    %16 = arith.select %13, %15, %4 : vector<1x256xi1>, vector<1x256xi32>
    %c0_i32_3 = arith.constant 0 : i32
    %17 = vector.broadcast %c0_i32_3 : i32 to vector<1x256xi32>
    %18 = arith.cmpi ne, %16, %17 : vector<1x256xi32>
    %19 = arith.extui %18 : vector<1x256xi1> to vector<1x256xi32>
    %20 = arith.sitofp %19 : vector<1x256xi32> to vector<1x256xf32>
    %cst = arith.constant 1.000000e+00 : f32
    %21 = vector.broadcast %cst : f32 to vector<1x256xf32>
    %c15_i32 = arith.constant 15 : i32
    %22 = vector.broadcast %c15_i32 : i32 to vector<1x256xi32>
    %23 = arith.cmpi ne, %16, %22 : vector<1x256xi32>
    %24 = arith.extui %23 : vector<1x256xi1> to vector<1x256xi32>
    %25 = arith.sitofp %24 : vector<1x256xi32> to vector<1x256xf32>
    %c0 = arith.constant 0 : index
    %c0_4 = arith.constant 0 : index
    %c0_5 = arith.constant 0 : index
    %26 = vector.load %arg1[%c0, %c0_4, %c0_5] : memref<2x8x290xf32, #tpu.memory_space<vmem>>, vector<1x8x290xf32>
    %27 = vector.shape_cast %26 : vector<1x8x290xf32> to vector<8x290xf32>
    %c0_6 = arith.constant 0 : index
    %c0_7 = arith.constant 0 : index
    %c0_8 = arith.constant 0 : index
    %28 = vector.load %arg2[%c0_6, %c0_7, %c0_8] : memref<2x1x290xf32, #tpu.memory_space<vmem>>, vector<1x1x290xf32>
    %29 = vector.shape_cast %28 : vector<1x1x290xf32> to vector<1x290xf32>
    %30 = vector.extract_strided_slice %29 {offsets = [0, 17], sizes = [1, 256], strides = [1, 1]} : vector<1x290xf32> to vector<1x256xf32>
    %31 = vector.extract_strided_slice %29 {offsets = [0, 0], sizes = [1, 256], strides = [1, 1]} : vector<1x290xf32> to vector<1x256xf32>
    %32 = vector.extract_strided_slice %27 {offsets = [0, 0], sizes = [8, 256], strides = [1, 1]} : vector<8x290xf32> to vector<8x256xf32>
    %33 = arith.subf %30, %31 : vector<1x256xf32>
    %34 = math.absf %33 : vector<1x256xf32>
    %cst_9 = arith.constant -8.300000e+00 : f32
    %35 = vector.broadcast %cst_9 : f32 to vector<1x256xf32>
    %36 = arith.mulf %35, %34 : vector<1x256xf32>
    %37 = math.exp %36 : vector<1x256xf32>
    %38 = arith.mulf %37, %20 : vector<1x256xf32>
    %39 = vector.broadcast %38 : vector<1x256xf32> to vector<8x256xf32>
    %40 = arith.mulf %32, %39 : vector<8x256xf32>
    %c0_10 = arith.constant 0 : index
    %c0_11 = arith.constant 0 : index
    %41 = vector.load %arg6[%c0_10, %c0_11] : memref<72x512xf32, #tpu.memory_space<vmem>>, vector<8x256xf32>
    tpu.vector_store %arg6[%c0_10, %c0_11], %40 {strides = array<i32>} : memref<72x512xf32, #tpu.memory_space<vmem>>, vector<8x256xf32>,
    %42 = vector.extract_strided_slice %29 {offsets = [0, 1], sizes = [1, 256], strides = [1, 1]} : vector<1x290xf32> to vector<1x256xf32>
    %43 = vector.extract_strided_slice %27 {offsets = [0, 1], sizes = [8, 256], strides = [1, 1]} : vector<8x290xf32> to vector<8x256xf32>
    %44 = arith.subf %30, %42 : vector<1x256xf32>
    %45 = math.absf %44 : vector<1x256xf32>
    %cst_12 = arith.constant -8.300000e+00 : f32
    %46 = vector.broadcast %cst_12 : f32 to vector<1x256xf32>
    %47 = arith.mulf %46, %45 : vector<1x256xf32>
    %48 = math.exp %47 : vector<1x256xf32>
    %49 = arith.mulf %48, %21 : vector<1x256xf32>
    %50 = vector.broadcast %49 : vector<1x256xf32> to vector<8x256xf32>
    %51 = arith.mulf %43, %50 : vector<8x256xf32>
    %c8 = arith.constant 8 : index
    %c0_13 = arith.constant 0 : index
    %52 = vector.load %arg6[%c8, %c0_13] : memref<72x512xf32, #tpu.memory_space<vmem>>, vector<8x256xf32>
    tpu.vector_store %arg6[%c8, %c0_13], %51 {strides = array<i32>} : memref<72x512xf32, #tpu.memory_space<vmem>>, vector<8x256xf32>,
    %53 = vector.extract_strided_slice %29 {offsets = [0, 2], sizes = [1, 256], strides = [1, 1]} : vector<1x290xf32> to vector<1x256xf32>
    %54 = vector.extract_strided_slice %27 {offsets = [0, 2], sizes = [8, 256], strides = [1, 1]} : vector<8x290xf32> to vector<8x256xf32>
    %55 = arith.subf %30, %53 : vector<1x256xf32>
    %56 = math.absf %55 : vector<1x256xf32>
    %cst_14 = arith.constant -8.300000e+00 : f32
    %57 = vector.broadcast %cst_14 : f32 to vector<1x256xf32>
    %58 = arith.mulf %57, %56 : vector<1x256xf32>
    %59 = math.exp %58 : vector<1x256xf32>
    %60 = arith.mulf %59, %25 : vector<1x256xf32>
    %61 = vector.broadcast %60 : vector<1x256xf32> to vector<8x256xf32>
    %62 = arith.mulf %54, %61 : vector<8x256xf32>
    %c16 = arith.constant 16 : index
    %c0_15 = arith.constant 0 : index
    %63 = vector.load %arg6[%c16, %c0_15] : memref<72x512xf32, #tpu.memory_space<vmem>>, vector<8x256xf32>
    tpu.vector_store %arg6[%c16, %c0_15], %62 {strides = array<i32>} : memref<72x512xf32, #tpu.memory_space<vmem>>, vector<8x256xf32>,
    %64 = vector.extract_strided_slice %29 {offsets = [0, 16], sizes = [1, 256], strides = [1, 1]} : vector<1x290xf32> to vector<1x256xf32>
    %65 = vector.extract_strided_slice %27 {offsets = [0, 16], sizes = [8, 256], strides = [1, 1]} : vector<8x290xf32> to vector<8x256xf32>
    %66 = arith.subf %30, %64 : vector<1x256xf32>
    %67 = math.absf %66 : vector<1x256xf32>
    %cst_16 = arith.constant -8.300000e+00 : f32
    %68 = vector.broadcast %cst_16 : f32 to vector<1x256xf32>
    %69 = arith.mulf %68, %67 : vector<1x256xf32>
    %70 = math.exp %69 : vector<1x256xf32>
    %71 = arith.mulf %70, %20 : vector<1x256xf32>
    %72 = vector.broadcast %71 : vector<1x256xf32> to vector<8x256xf32>
    %73 = arith.mulf %65, %72 : vector<8x256xf32>
    %c24 = arith.constant 24 : index
    %c0_17 = arith.constant 0 : index
    %74 = vector.load %arg6[%c24, %c0_17] : memref<72x512xf32, #tpu.memory_space<vmem>>, vector<8x256xf32>
    tpu.vector_store %arg6[%c24, %c0_17], %73 {strides = array<i32>} : memref<72x512xf32, #tpu.memory_space<vmem>>, vector<8x256xf32>,
    %75 = vector.extract_strided_slice %29 {offsets = [0, 17], sizes = [1, 256], strides = [1, 1]} : vector<1x290xf32> to vector<1x256xf32>
    %76 = vector.extract_strided_slice %27 {offsets = [0, 17], sizes = [8, 256], strides = [1, 1]} : vector<8x290xf32> to vector<8x256xf32>
    %77 = arith.subf %30, %75 : vector<1x256xf32>
    %78 = math.absf %77 : vector<1x256xf32>
    %cst_18 = arith.constant -8.300000e+00 : f32
    %79 = vector.broadcast %cst_18 : f32 to vector<1x256xf32>
    %80 = arith.mulf %79, %78 : vector<1x256xf32>
    %81 = math.exp %80 : vector<1x256xf32>
    %82 = arith.mulf %81, %21 : vector<1x256xf32>
    %83 = vector.broadcast %82 : vector<1x256xf32> to vector<8x256xf32>
    %84 = arith.mulf %76, %83 : vector<8x256xf32>
    %c32 = arith.constant 32 : index
    %c0_19 = arith.constant 0 : index
    %85 = vector.load %arg6[%c32, %c0_19] : memref<72x512xf32, #tpu.memory_space<vmem>>, vector<8x256xf32>
    tpu.vector_store %arg6[%c32, %c0_19], %84 {strides = array<i32>} : memref<72x512xf32, #tpu.memory_space<vmem>>, vector<8x256xf32>,
    %86 = vector.extract_strided_slice %29 {offsets = [0, 18], sizes = [1, 256], strides = [1, 1]} : vector<1x290xf32> to vector<1x256xf32>
    %87 = vector.extract_strided_slice %27 {offsets = [0, 18], sizes = [8, 256], strides = [1, 1]} : vector<8x290xf32> to vector<8x256xf32>
    %88 = arith.subf %30, %86 : vector<1x256xf32>
    %89 = math.absf %88 : vector<1x256xf32>
    %cst_20 = arith.constant -8.300000e+00 : f32
    %90 = vector.broadcast %cst_20 : f32 to vector<1x256xf32>
    %91 = arith.mulf %90, %89 : vector<1x256xf32>
    %92 = math.exp %91 : vector<1x256xf32>
    %93 = arith.mulf %92, %25 : vector<1x256xf32>
    %94 = vector.broadcast %93 : vector<1x256xf32> to vector<8x256xf32>
    %95 = arith.mulf %87, %94 : vector<8x256xf32>
    %c40 = arith.constant 40 : index
    %c0_21 = arith.constant 0 : index
    %96 = vector.load %arg6[%c40, %c0_21] : memref<72x512xf32, #tpu.memory_space<vmem>>, vector<8x256xf32>
    tpu.vector_store %arg6[%c40, %c0_21], %95 {strides = array<i32>} : memref<72x512xf32, #tpu.memory_space<vmem>>, vector<8x256xf32>,
    %97 = vector.extract_strided_slice %29 {offsets = [0, 32], sizes = [1, 256], strides = [1, 1]} : vector<1x290xf32> to vector<1x256xf32>
    %98 = vector.extract_strided_slice %27 {offsets = [0, 32], sizes = [8, 256], strides = [1, 1]} : vector<8x290xf32> to vector<8x256xf32>
    %99 = arith.subf %30, %97 : vector<1x256xf32>
    %100 = math.absf %99 : vector<1x256xf32>
    %cst_22 = arith.constant -8.300000e+00 : f32
    %101 = vector.broadcast %cst_22 : f32 to vector<1x256xf32>
    %102 = arith.mulf %101, %100 : vector<1x256xf32>
    %103 = math.exp %102 : vector<1x256xf32>
    %104 = arith.mulf %103, %20 : vector<1x256xf32>
    %105 = vector.broadcast %104 : vector<1x256xf32> to vector<8x256xf32>
    %106 = arith.mulf %98, %105 : vector<8x256xf32>
    %c48 = arith.constant 48 : index
    %c0_23 = arith.constant 0 : index
    %107 = vector.load %arg6[%c48, %c0_23] : memref<72x512xf32, #tpu.memory_space<vmem>>, vector<8x256xf32>
    tpu.vector_store %arg6[%c48, %c0_23], %106 {strides = array<i32>} : memref<72x512xf32, #tpu.memory_space<vmem>>, vector<8x256xf32>,
    %108 = vector.extract_strided_slice %29 {offsets = [0, 33], sizes = [1, 256], strides = [1, 1]} : vector<1x290xf32> to vector<1x256xf32>
    %109 = vector.extract_strided_slice %27 {offsets = [0, 33], sizes = [8, 256], strides = [1, 1]} : vector<8x290xf32> to vector<8x256xf32>
    %110 = arith.subf %30, %108 : vector<1x256xf32>
    %111 = math.absf %110 : vector<1x256xf32>
    %cst_24 = arith.constant -8.300000e+00 : f32
    %112 = vector.broadcast %cst_24 : f32 to vector<1x256xf32>
    %113 = arith.mulf %112, %111 : vector<1x256xf32>
    %114 = math.exp %113 : vector<1x256xf32>
    %115 = arith.mulf %114, %21 : vector<1x256xf32>
    %116 = vector.broadcast %115 : vector<1x256xf32> to vector<8x256xf32>
    %117 = arith.mulf %109, %116 : vector<8x256xf32>
    %c56 = arith.constant 56 : index
    %c0_25 = arith.constant 0 : index
    %118 = vector.load %arg6[%c56, %c0_25] : memref<72x512xf32, #tpu.memory_space<vmem>>, vector<8x256xf32>
    tpu.vector_store %arg6[%c56, %c0_25], %117 {strides = array<i32>} : memref<72x512xf32, #tpu.memory_space<vmem>>, vector<8x256xf32>,
    %119 = vector.extract_strided_slice %29 {offsets = [0, 34], sizes = [1, 256], strides = [1, 1]} : vector<1x290xf32> to vector<1x256xf32>
    %120 = vector.extract_strided_slice %27 {offsets = [0, 34], sizes = [8, 256], strides = [1, 1]} : vector<8x290xf32> to vector<8x256xf32>
    %121 = arith.subf %30, %119 : vector<1x256xf32>
    %122 = math.absf %121 : vector<1x256xf32>
    %cst_26 = arith.constant -8.300000e+00 : f32
    %123 = vector.broadcast %cst_26 : f32 to vector<1x256xf32>
    %124 = arith.mulf %123, %122 : vector<1x256xf32>
    %125 = math.exp %124 : vector<1x256xf32>
    %126 = arith.mulf %125, %25 : vector<1x256xf32>
    %127 = vector.broadcast %126 : vector<1x256xf32> to vector<8x256xf32>
    %128 = arith.mulf %120, %127 : vector<8x256xf32>
    %c64 = arith.constant 64 : index
    %c0_27 = arith.constant 0 : index
    %129 = vector.load %arg6[%c64, %c0_27] : memref<72x512xf32, #tpu.memory_space<vmem>>, vector<8x256xf32>
    tpu.vector_store %arg6[%c64, %c0_27], %128 {strides = array<i32>} : memref<72x512xf32, #tpu.memory_space<vmem>>, vector<8x256xf32>,
    %c1 = arith.constant 1 : index
    %c0_28 = arith.constant 0 : index
    %c0_29 = arith.constant 0 : index
    %130 = vector.load %arg1[%c1, %c0_28, %c0_29] : memref<2x8x290xf32, #tpu.memory_space<vmem>>, vector<1x8x290xf32>
    %131 = vector.shape_cast %130 : vector<1x8x290xf32> to vector<8x290xf32>
    %c1_30 = arith.constant 1 : index
    %c0_31 = arith.constant 0 : index
    %c0_32 = arith.constant 0 : index
    %132 = vector.load %arg2[%c1_30, %c0_31, %c0_32] : memref<2x1x290xf32, #tpu.memory_space<vmem>>, vector<1x1x290xf32>
    %133 = vector.shape_cast %132 : vector<1x1x290xf32> to vector<1x290xf32>
    %134 = vector.extract_strided_slice %133 {offsets = [0, 17], sizes = [1, 256], strides = [1, 1]} : vector<1x290xf32> to vector<1x256xf32>
    %135 = vector.extract_strided_slice %133 {offsets = [0, 0], sizes = [1, 256], strides = [1, 1]} : vector<1x290xf32> to vector<1x256xf32>
    %136 = vector.extract_strided_slice %131 {offsets = [0, 0], sizes = [8, 256], strides = [1, 1]} : vector<8x290xf32> to vector<8x256xf32>
    %137 = arith.subf %134, %135 : vector<1x256xf32>
    %138 = math.absf %137 : vector<1x256xf32>
    %cst_33 = arith.constant -8.300000e+00 : f32
    %139 = vector.broadcast %cst_33 : f32 to vector<1x256xf32>
    %140 = arith.mulf %139, %138 : vector<1x256xf32>
    %141 = math.exp %140 : vector<1x256xf32>
    %142 = arith.mulf %141, %20 : vector<1x256xf32>
    %143 = vector.broadcast %142 : vector<1x256xf32> to vector<8x256xf32>
    %144 = arith.mulf %136, %143 : vector<8x256xf32>
    %c0_34 = arith.constant 0 : index
    %c256 = arith.constant 256 : index
    %145 = vector.load %arg6[%c0_34, %c256] : memref<72x512xf32, #tpu.memory_space<vmem>>, vector<8x256xf32>
    tpu.vector_store %arg6[%c0_34, %c256], %144 {strides = array<i32>} : memref<72x512xf32, #tpu.memory_space<vmem>>, vector<8x256xf32>,
    %146 = vector.extract_strided_slice %133 {offsets = [0, 1], sizes = [1, 256], strides = [1, 1]} : vector<1x290xf32> to vector<1x256xf32>
    %147 = vector.extract_strided_slice %131 {offsets = [0, 1], sizes = [8, 256], strides = [1, 1]} : vector<8x290xf32> to vector<8x256xf32>
    %148 = arith.subf %134, %146 : vector<1x256xf32>
    %149 = math.absf %148 : vector<1x256xf32>
    %cst_35 = arith.constant -8.300000e+00 : f32
    %150 = vector.broadcast %cst_35 : f32 to vector<1x256xf32>
    %151 = arith.mulf %150, %149 : vector<1x256xf32>
    %152 = math.exp %151 : vector<1x256xf32>
    %153 = arith.mulf %152, %21 : vector<1x256xf32>
    %154 = vector.broadcast %153 : vector<1x256xf32> to vector<8x256xf32>
    %155 = arith.mulf %147, %154 : vector<8x256xf32>
    %c8_36 = arith.constant 8 : index
    %c256_37 = arith.constant 256 : index
    %156 = vector.load %arg6[%c8_36, %c256_37] : memref<72x512xf32, #tpu.memory_space<vmem>>, vector<8x256xf32>
    tpu.vector_store %arg6[%c8_36, %c256_37], %155 {strides = array<i32>} : memref<72x512xf32, #tpu.memory_space<vmem>>, vector<8x256xf32>,
    %157 = vector.extract_strided_slice %133 {offsets = [0, 2], sizes = [1, 256], strides = [1, 1]} : vector<1x290xf32> to vector<1x256xf32>
    %158 = vector.extract_strided_slice %131 {offsets = [0, 2], sizes = [8, 256], strides = [1, 1]} : vector<8x290xf32> to vector<8x256xf32>
    %159 = arith.subf %134, %157 : vector<1x256xf32>
    %160 = math.absf %159 : vector<1x256xf32>
    %cst_38 = arith.constant -8.300000e+00 : f32
    %161 = vector.broadcast %cst_38 : f32 to vector<1x256xf32>
    %162 = arith.mulf %161, %160 : vector<1x256xf32>
    %163 = math.exp %162 : vector<1x256xf32>
    %164 = arith.mulf %163, %25 : vector<1x256xf32>
    %165 = vector.broadcast %164 : vector<1x256xf32> to vector<8x256xf32>
    %166 = arith.mulf %158, %165 : vector<8x256xf32>
    %c16_39 = arith.constant 16 : index
    %c256_40 = arith.constant 256 : index
    %167 = vector.load %arg6[%c16_39, %c256_40] : memref<72x512xf32, #tpu.memory_space<vmem>>, vector<8x256xf32>
    tpu.vector_store %arg6[%c16_39, %c256_40], %166 {strides = array<i32>} : memref<72x512xf32, #tpu.memory_space<vmem>>, vector<8x256xf32>,
    %168 = vector.extract_strided_slice %133 {offsets = [0, 16], sizes = [1, 256], strides = [1, 1]} : vector<1x290xf32> to vector<1x256xf32>
    %169 = vector.extract_strided_slice %131 {offsets = [0, 16], sizes = [8, 256], strides = [1, 1]} : vector<8x290xf32> to vector<8x256xf32>
    %170 = arith.subf %134, %168 : vector<1x256xf32>
    %171 = math.absf %170 : vector<1x256xf32>
    %cst_41 = arith.constant -8.300000e+00 : f32
    %172 = vector.broadcast %cst_41 : f32 to vector<1x256xf32>
    %173 = arith.mulf %172, %171 : vector<1x256xf32>
    %174 = math.exp %173 : vector<1x256xf32>
    %175 = arith.mulf %174, %20 : vector<1x256xf32>
    %176 = vector.broadcast %175 : vector<1x256xf32> to vector<8x256xf32>
    %177 = arith.mulf %169, %176 : vector<8x256xf32>
    %c24_42 = arith.constant 24 : index
    %c256_43 = arith.constant 256 : index
    %178 = vector.load %arg6[%c24_42, %c256_43] : memref<72x512xf32, #tpu.memory_space<vmem>>, vector<8x256xf32>
    tpu.vector_store %arg6[%c24_42, %c256_43], %177 {strides = array<i32>} : memref<72x512xf32, #tpu.memory_space<vmem>>, vector<8x256xf32>,
    %179 = vector.extract_strided_slice %133 {offsets = [0, 17], sizes = [1, 256], strides = [1, 1]} : vector<1x290xf32> to vector<1x256xf32>
    %180 = vector.extract_strided_slice %131 {offsets = [0, 17], sizes = [8, 256], strides = [1, 1]} : vector<8x290xf32> to vector<8x256xf32>
    %181 = arith.subf %134, %179 : vector<1x256xf32>
    %182 = math.absf %181 : vector<1x256xf32>
    %cst_44 = arith.constant -8.300000e+00 : f32
    %183 = vector.broadcast %cst_44 : f32 to vector<1x256xf32>
    %184 = arith.mulf %183, %182 : vector<1x256xf32>
    %185 = math.exp %184 : vector<1x256xf32>
    %186 = arith.mulf %185, %21 : vector<1x256xf32>
    %187 = vector.broadcast %186 : vector<1x256xf32> to vector<8x256xf32>
    %188 = arith.mulf %180, %187 : vector<8x256xf32>
    %c32_45 = arith.constant 32 : index
    %c256_46 = arith.constant 256 : index
    %189 = vector.load %arg6[%c32_45, %c256_46] : memref<72x512xf32, #tpu.memory_space<vmem>>, vector<8x256xf32>
    tpu.vector_store %arg6[%c32_45, %c256_46], %188 {strides = array<i32>} : memref<72x512xf32, #tpu.memory_space<vmem>>, vector<8x256xf32>,
    %190 = vector.extract_strided_slice %133 {offsets = [0, 18], sizes = [1, 256], strides = [1, 1]} : vector<1x290xf32> to vector<1x256xf32>
    %191 = vector.extract_strided_slice %131 {offsets = [0, 18], sizes = [8, 256], strides = [1, 1]} : vector<8x290xf32> to vector<8x256xf32>
    %192 = arith.subf %134, %190 : vector<1x256xf32>
    %193 = math.absf %192 : vector<1x256xf32>
    %cst_47 = arith.constant -8.300000e+00 : f32
    %194 = vector.broadcast %cst_47 : f32 to vector<1x256xf32>
    %195 = arith.mulf %194, %193 : vector<1x256xf32>
    %196 = math.exp %195 : vector<1x256xf32>
    %197 = arith.mulf %196, %25 : vector<1x256xf32>
    %198 = vector.broadcast %197 : vector<1x256xf32> to vector<8x256xf32>
    %199 = arith.mulf %191, %198 : vector<8x256xf32>
    %c40_48 = arith.constant 40 : index
    %c256_49 = arith.constant 256 : index
    %200 = vector.load %arg6[%c40_48, %c256_49] : memref<72x512xf32, #tpu.memory_space<vmem>>, vector<8x256xf32>
    tpu.vector_store %arg6[%c40_48, %c256_49], %199 {strides = array<i32>} : memref<72x512xf32, #tpu.memory_space<vmem>>, vector<8x256xf32>,
    %201 = vector.extract_strided_slice %133 {offsets = [0, 32], sizes = [1, 256], strides = [1, 1]} : vector<1x290xf32> to vector<1x256xf32>
    %202 = vector.extract_strided_slice %131 {offsets = [0, 32], sizes = [8, 256], strides = [1, 1]} : vector<8x290xf32> to vector<8x256xf32>
    %203 = arith.subf %134, %201 : vector<1x256xf32>
    %204 = math.absf %203 : vector<1x256xf32>
    %cst_50 = arith.constant -8.300000e+00 : f32
    %205 = vector.broadcast %cst_50 : f32 to vector<1x256xf32>
    %206 = arith.mulf %205, %204 : vector<1x256xf32>
    %207 = math.exp %206 : vector<1x256xf32>
    %208 = arith.mulf %207, %20 : vector<1x256xf32>
    %209 = vector.broadcast %208 : vector<1x256xf32> to vector<8x256xf32>
    %210 = arith.mulf %202, %209 : vector<8x256xf32>
    %c48_51 = arith.constant 48 : index
    %c256_52 = arith.constant 256 : index
    %211 = vector.load %arg6[%c48_51, %c256_52] : memref<72x512xf32, #tpu.memory_space<vmem>>, vector<8x256xf32>
    tpu.vector_store %arg6[%c48_51, %c256_52], %210 {strides = array<i32>} : memref<72x512xf32, #tpu.memory_space<vmem>>, vector<8x256xf32>,
    %212 = vector.extract_strided_slice %133 {offsets = [0, 33], sizes = [1, 256], strides = [1, 1]} : vector<1x290xf32> to vector<1x256xf32>
    %213 = vector.extract_strided_slice %131 {offsets = [0, 33], sizes = [8, 256], strides = [1, 1]} : vector<8x290xf32> to vector<8x256xf32>
    %214 = arith.subf %134, %212 : vector<1x256xf32>
    %215 = math.absf %214 : vector<1x256xf32>
    %cst_53 = arith.constant -8.300000e+00 : f32
    %216 = vector.broadcast %cst_53 : f32 to vector<1x256xf32>
    %217 = arith.mulf %216, %215 : vector<1x256xf32>
    %218 = math.exp %217 : vector<1x256xf32>
    %219 = arith.mulf %218, %21 : vector<1x256xf32>
    %220 = vector.broadcast %219 : vector<1x256xf32> to vector<8x256xf32>
    %221 = arith.mulf %213, %220 : vector<8x256xf32>
    %c56_54 = arith.constant 56 : index
    %c256_55 = arith.constant 256 : index
    %222 = vector.load %arg6[%c56_54, %c256_55] : memref<72x512xf32, #tpu.memory_space<vmem>>, vector<8x256xf32>
    tpu.vector_store %arg6[%c56_54, %c256_55], %221 {strides = array<i32>} : memref<72x512xf32, #tpu.memory_space<vmem>>, vector<8x256xf32>,
    %223 = vector.extract_strided_slice %133 {offsets = [0, 34], sizes = [1, 256], strides = [1, 1]} : vector<1x290xf32> to vector<1x256xf32>
    %224 = vector.extract_strided_slice %131 {offsets = [0, 34], sizes = [8, 256], strides = [1, 1]} : vector<8x290xf32> to vector<8x256xf32>
    %225 = arith.subf %134, %223 : vector<1x256xf32>
    %226 = math.absf %225 : vector<1x256xf32>
    %cst_56 = arith.constant -8.300000e+00 : f32
    %227 = vector.broadcast %cst_56 : f32 to vector<1x256xf32>
    %228 = arith.mulf %227, %226 : vector<1x256xf32>
    %229 = math.exp %228 : vector<1x256xf32>
    %230 = arith.mulf %229, %25 : vector<1x256xf32>
    %231 = vector.broadcast %230 : vector<1x256xf32> to vector<8x256xf32>
    %232 = arith.mulf %224, %231 : vector<8x256xf32>
    %c64_57 = arith.constant 64 : index
    %c256_58 = arith.constant 256 : index
    %233 = vector.load %arg6[%c64_57, %c256_58] : memref<72x512xf32, #tpu.memory_space<vmem>>, vector<8x256xf32>
    tpu.vector_store %arg6[%c64_57, %c256_58], %232 {strides = array<i32>} : memref<72x512xf32, #tpu.memory_space<vmem>>, vector<8x256xf32>,
    %c0_59 = arith.constant 0 : index
    %c0_60 = arith.constant 0 : index
    %234 = vector.load %arg3[%c0_59, %c0_60] : memref<8x72xf32, #tpu.memory_space<vmem>>, vector<8x72xf32>
    %c0_61 = arith.constant 0 : index
    %c0_62 = arith.constant 0 : index
    %235 = vector.load %arg6[%c0_61, %c0_62] : memref<72x512xf32, #tpu.memory_space<vmem>>, vector<72x512xf32>
    %cst_63 = arith.constant dense<0.000000e+00> : vector<8x512xf32>
    %236 = tpu.matmul %234, %235, %cst_63 {dimension_numbers = #tpu.dot_dimension_numbers<[1], [0], [0], [1], [0, 0, 1, 1], [], []>} : vector<8x72xf32>, vector<72x512xf32>, vector<8x512xf32> -> vector<8x512xf32>
    %c0_64 = arith.constant 0 : index
    %c0_65 = arith.constant 0 : index
    %237 = vector.load %arg4[%c0_64, %c0_65] : memref<8x1xf32, #tpu.memory_space<vmem>>, vector<8x1xf32>
    %238 = vector.broadcast %237 : vector<8x1xf32> to vector<8x512xf32>
    %239 = arith.addf %236, %238 : vector<8x512xf32>
    %cst_66 = arith.constant 0.000000e+00 : f32
    %240 = vector.broadcast %cst_66 : f32 to vector<8x512xf32>
    %241 = arith.maximumf %239, %240 : vector<8x512xf32>
    %242 = vector.extract_strided_slice %241 {offsets = [0, 0], sizes = [8, 256], strides = [1, 1]} : vector<8x512xf32> to vector<8x256xf32>
    %c0_67 = arith.constant 0 : index
    %c0_68 = arith.constant 0 : index
    %c0_69 = arith.constant 0 : index
    %243 = vector.load %arg5[%c0_67, %c0_68, %c0_69] : memref<2x8x256xf32, #tpu.memory_space<vmem>>, vector<1x8x256xf32>
    %244 = vector.shape_cast %243 : vector<1x8x256xf32> to vector<8x256xf32>
    %245 = vector.shape_cast %242 : vector<8x256xf32> to vector<1x8x256xf32>
    tpu.vector_store %arg5[%c0_67, %c0_68, %c0_69], %245 {strides = array<i32>} : memref<2x8x256xf32, #tpu.memory_space<vmem>>, vector<1x8x256xf32>,
    %246 = vector.extract_strided_slice %241 {offsets = [0, 256], sizes = [8, 256], strides = [1, 1]} : vector<8x512xf32> to vector<8x256xf32>
    %c1_70 = arith.constant 1 : index
    %c0_71 = arith.constant 0 : index
    %c0_72 = arith.constant 0 : index
    %247 = vector.load %arg5[%c1_70, %c0_71, %c0_72] : memref<2x8x256xf32, #tpu.memory_space<vmem>>, vector<1x8x256xf32>
    %248 = vector.shape_cast %247 : vector<1x8x256xf32> to vector<8x256xf32>
    %249 = vector.shape_cast %246 : vector<8x256xf32> to vector<1x8x256xf32>
    tpu.vector_store %arg5[%c1_70, %c0_71, %c0_72], %249 {strides = array<i32>} : memref<2x8x256xf32, #tpu.memory_space<vmem>>, vector<1x8x256xf32>,
    return
  }
  func.func @transform_0(%arg0: i32) -> (i32, i32, i32) {
    %c0_i32 = arith.constant 0 : i32
    %c0_i32_0 = arith.constant 0 : i32
    %c0_i32_1 = arith.constant 0 : i32
    return %arg0, %c0_i32, %c0_i32_0 : i32, i32, i32
  }
  func.func @transform_1(%arg0: i32) -> (i32, i32, i32) {
    %c0_i32 = arith.constant 0 : i32
    %c0_i32_0 = arith.constant 0 : i32
    %c0_i32_1 = arith.constant 0 : i32
    return %arg0, %c0_i32, %c0_i32_0 : i32, i32, i32
  }
  func.func @transform_2(%arg0: i32) -> (i32, i32) {
    %c0_i32 = arith.constant 0 : i32
    %c0_i32_0 = arith.constant 0 : i32
    %c0_i32_1 = arith.constant 0 : i32
    return %c0_i32, %c0_i32_0 : i32, i32
  }
  func.func @transform_3(%arg0: i32) -> (i32, i32) {
    %c0_i32 = arith.constant 0 : i32
    %c0_i32_0 = arith.constant 0 : i32
    %c0_i32_1 = arith.constant 0 : i32
    return %c0_i32, %c0_i32_0 : i32, i32
  }
  func.func @transform_4(%arg0: i32) -> (i32, i32, i32) {
    %c0_i32 = arith.constant 0 : i32
    %c0_i32_0 = arith.constant 0 : i32
    %c0_i32_1 = arith.constant 0 : i32
    return %arg0, %c0_i32, %c0_i32_0 : i32, i32, i32
  }
}

</mosaic_0001>

<llo_original>
// kernel: tpu_custom_call.1
$region0: #{tpu_custom_call.1}
  #allocation0 [shape = 'u32[]', space=smem, size = 0x4, offset = 0x4, fixed_abs, tag = 'smem constant byte address 0x4 - core index']
  #allocation1 [shape = 'u32[72,128]{1,0:T(1,128)}', space=vmem, size = 0x9000, scoped, tag = 'internal scratch']
  #allocation2 [shape = 'f32[72,512]{1,0:T(8,128)}', space=vmem, size = 0x24000, scoped, tag = 'scratch operand']
  %s0 = inlined_call_operand.hbm [shape: f32[2,8,290], index: 0, kind: input, shape index: {}]
  %s1 = inlined_call_operand.hbm [shape: f32[2,1,290], index: 1, kind: input, shape index: {}]
  %s2 = inlined_call_operand.vmem [shape: f32[8,72], index: 2, kind: input, shape index: {}]
  %s3 = inlined_call_operand.vmem [shape: f32[8,1], index: 3, kind: input, shape index: {}]
  %s4 = inlined_call_operand.hbm [shape: f32[2,8,256], index: 4, kind: output, shape index: {}]
  %s5 = sld [smem:[#allocation0]]
  $region34: #{tpu_custom_call.1} parent=0
    _
  %s7 = ssub.s32 1, %s5
  %s8 = scalar_select 0, %s7, %s5
  $region1: #{tpu_custom_call.1} parent=0
    #allocation3 [shape = 'u8[24576]{0}', space=vmem, size = 0x6000, scoped, tag = 'input window, operand 0, single buffered']
    #allocation4 [shape = 's32[1]{0}', space=sflag, size = 0x4, scoped, tag = 'scoped memory for tpu_custom_call.1']
    #allocation5 [shape = 's32[1]{0}', space=sflag, size = 0x4, scoped, tag = 'scoped memory for tpu_custom_call.1']
    #allocation6 [shape = 'u8[3072]{0}', space=vmem, size = 0xc00, scoped, tag = 'input window, operand 1, single buffered']
    #allocation7 [shape = 's32[1]{0}', space=sflag, size = 0x4, scoped, tag = 'scoped memory for tpu_custom_call.1']
    #allocation8 [shape = 'u8[16384]{0}', space=vmem, size = 0x4000, scoped, tag = 'output window, operand 0, single buffered']
    %9 = vsyncpa [#allocation4], 0
    %10 = vsyncpa [#allocation7], 0
    %11 = vsyncpa [#allocation5], 0
    // Predicated region
    $region2: #{tpu_custom_call.1} parent=1 // pred_check
      _
    $region3: #{tpu_custom_call.1} parent=1 // pred_check_branch
      %13 = sbr.rel (0) target = $region5
    $region4: #{tpu_custom_call.1} parent=1 // pred_region
      %15 = vsyncadd [#allocation4], 0
      %s16 = sshll.u32 %s0, 4
      %s17 = int_to_ptr.hbm [resolvable:$true] %s16
      %s18 = sshll.u32 [#allocation3], 4
      %s19 = int_to_ptr.vmem [resolvable:$true] %s18
      %24 = dma.hbm_to_vmem [thread:$0]  %s17, 768, %s19, [#allocation4], 384, 384, 24
    $region5: #{tpu_custom_call.1} parent=1 // pred_fallthru
      _
    // Predicated region
    $region6: #{tpu_custom_call.1} parent=1 // pred_check
      _
    $region7: #{tpu_custom_call.1} parent=1 // pred_check_branch
      %26 = sbr.rel (0) target = $region9
    $region8: #{tpu_custom_call.1} parent=1 // pred_region
      %28 = vsyncadd [#allocation7], 0
      %s29 = sshll.u32 %s1, 4
      %s30 = int_to_ptr.hbm [resolvable:$true] %s29
      %s31 = sshll.u32 [#allocation6], 4
      %s32 = int_to_ptr.vmem [resolvable:$true] %s31
      %37 = dma.hbm_to_vmem [thread:$0]  %s30, 96, %s32, [#allocation7], 48, 48, 3
    $region9: #{tpu_custom_call.1} parent=1 // pred_fallthru
      _
    // Predicated region
    $region10: #{tpu_custom_call.1} parent=1 // pred_check
      _
    $region11: #{tpu_custom_call.1} parent=1 // pred_check_branch
      %39 = sbr.rel (0) target = $region13
    $region12: #{tpu_custom_call.1} parent=1 // pred_region
      _
    $region13: #{tpu_custom_call.1} parent=1 // pred_fallthru
      _
    // Predicated region
    $region14: #{tpu_custom_call.1} parent=1 // pred_check
      _
    $region15: #{tpu_custom_call.1} parent=1 // pred_check_branch
      %41 = sbr.rel (0) target = $region17
    $region16: #{tpu_custom_call.1} parent=1 // pred_region
      _
    $region17: #{tpu_custom_call.1} parent=1 // pred_fallthru
      _
    // Predicated region
    $region18: #{tpu_custom_call.1} parent=1 // pred_check
      _
    $region19: #{tpu_custom_call.1} parent=1 // pred_check_branch
      %43 = sbr.rel (0) target = $region21
    $region20: #{tpu_custom_call.1} parent=1 // pred_region
      %45 = dma.done [#allocation4], 768
    $region21: #{tpu_custom_call.1} parent=1 // pred_fallthru
      _
    // Predicated region
    $region22: #{tpu_custom_call.1} parent=1 // pred_check
      _
    $region23: #{tpu_custom_call.1} parent=1 // pred_check_branch
      %47 = sbr.rel (0) target = $region25
    $region24: #{tpu_custom_call.1} parent=1 // pred_region
      %49 = dma.done [#allocation7], 96
    $region25: #{tpu_custom_call.1} parent=1 // pred_fallthru
      _
    %v50 = vlaneseq
    %v51 = vand.u32 %v50, 127
    %v52 = vadd.s32 %v51, 128
    %vm53 = vcmp.lt.s32.totalorder %v51, 0
    %v54 = vsub.s32 0, %v51
    %v55 = vsel %vm53, %v54, %v51
    %v56 = vshrl.u32 %v55, 4
    %v57 = vand.u32 %v55, 15
    %v58 = vsub.s32 0, %v57
    %v59 = vsel %vm53, %v58, %v57
    %vm60 = vcmp.lt.s32.totalorder %v52, 0
    %v61 = vsub.s32 0, %v52
    %v62 = vsel %vm60, %v61, %v52
    %v63 = vshrl.u32 %v62, 4
    %v64 = vand.u32 %v62, 15
    %v65 = vsub.s32 0, %v64
    %v66 = vsel %vm60, %v65, %v64
    %vm67 = vcmp.ne.s32.totalorder %v59, 0
    %vm68 = vcmp.ne.s32.totalorder %v66, 0
    %vm69 = vcmp.lt.s32.totalorder %v59, 0
    %vm70 = vcmp.lt.s32.totalorder %v66, 0
    %vm71 = vmand %vm69, %vm67
    %vm72 = vmand %vm70, %vm68
    %v73 = vadd.s32 %v59, 16
    %v74 = vadd.s32 %v66, 16
    %v75 = vsel %vm71, %v73, %v59
    %v76 = vsel %vm72, %v74, %v66
    %vm77 = vcmp.ne.s32.totalorder %v75, 0
    %vm78 = vcmp.ne.s32.totalorder %v76, 0
    %v79 = vsel %vm77, 1, 0
    %v80 = vsel %vm78, 1, 0
    %v81 = vcvt.s32.f32 %v79
    %v82 = vcvt.s32.f32 %v80
    %vm83 = vcmp.ne.s32.totalorder %v75, 15
    %vm84 = vcmp.ne.s32.totalorder %v76, 15
    %v85 = vsel %vm83, 1, 0
    %v86 = vsel %vm84, 1, 0
    %v87 = vcvt.s32.f32 %v85
    %v88 = vcvt.s32.f32 %v86
    %v89 = vld [vmem:[#allocation3] sm:$0xff]
    %v90 = vld [vmem:[#allocation3 + $0x8] sm:$0xff]
    %v91 = vld [vmem:[#allocation3 + $0x10] sm:$0xff]
    %v92 = vld [vmem:[#allocation6] sm:$0x7]
    %94 = vrot.lane.b32.xlu0 %v92, 17
    %v95 = vpop.permute.xlu0 %94
    %v96 = vrot.slane %v95, 7
    %vm97 = vcmask 138240
    %v98 = vsel %vm97, %v96, %v95
    %v100 = vsub.f32 %v92, %v98
    %v101 = vand.u32 2147483647, %v100
    %v102 = vmul.f32 %v101, -8.3
    %v103 = vmul.f32 %v102, 1.442695
    %v104 = vpow.pop %v103
    %v107 = vrot.slane %v82, 7
    %vm108 = vcmask 1040384
    %v109 = vsel %vm108, %v81, %v107
    %110 = vrot.lane.b32.xlu0 %v109, 17
    %v111 = vpop.permute.xlu0 %110
    %v112 = vrot.slane %v111, 7
    %v113 = vsel %vm97, %v112, %v111
    %v115 = vmul.f32 %v104, %v113
    %v117 = vperm.slane %v115, 0
    %v118 = vperm.slane %v115, 1
    %v119 = vperm.slane %v115, 2
    %120 = vrot.lane.b32.xlu0 %v117, 111
    %v121 = vpop.permute.xlu0 %120
    %122 = vrot.lane.b32.xlu0 %v118, 111
    %v123 = vpop.permute.xlu0 %122
    %124 = vrot.lane.b32.xlu0 %v119, 111
    %v125 = vpop.permute.xlu0 %124
    %vm126 = vcmask 908288
    %v127 = vsel %vm126, %v121, %v123
    %v128 = vsel %vm126, %v123, %v125
    %v131 = vmul.f32 %v89, %v127
    %v132 = vmul.f32 %v90, %v128
    %133 = vst [vmem:[#allocation2] sm:$0xff] %v131
    %134 = vst [vmem:[#allocation2 + $0x8] sm:$0xff] %v132
    %135 = vrot.lane.b32.xlu0 %v92, 16
    %v136 = vpop.permute.xlu0 %135
    %v137 = vrot.slane %v136, 7
    %vm138 = vcmask 130048
    %v139 = vsel %vm138, %v137, %v136
    %v141 = vsub.f32 %v92, %v139
    %v142 = vand.u32 2147483647, %v141
    %v143 = vmul.f32 %v142, -8.3
    %v144 = vmul.f32 %v143, 1.442695
    %v145 = vpow.pop %v144
    %v147 = vperm.slane %v145, 0
    %v148 = vperm.slane %v145, 1
    %v149 = vperm.slane %v145, 2
    %150 = vrot.lane.b32.xlu0 %v147, 112
    %v151 = vpop.permute.xlu0 %150
    %152 = vrot.lane.b32.xlu0 %v148, 112
    %v153 = vpop.permute.xlu0 %152
    %154 = vrot.lane.b32.xlu0 %v149, 112
    %v155 = vpop.permute.xlu0 %154
    %vm156 = vcmask 916480
    %v157 = vsel %vm156, %v151, %v153
    %v158 = vsel %vm156, %v153, %v155
    %v162 = vmul.f32 %v89, %v157
    %v163 = vmul.f32 %v90, %v158
    %v164 = vmul.f32 %v91, %v155
    %168 = vrot.lane.b32.xlu0 %v162, 127
    %v169 = vpop.permute.xlu0 %168
    %170 = vrot.lane.b32.xlu0 %v163, 127
    %v171 = vpop.permute.xlu0 %170
    %172 = vrot.lane.b32.xlu0 %v164, 127
    %v173 = vpop.permute.xlu0 %172
    %vm174 = vcmask 1039360
    %v175 = vsel %vm174, %v169, %v171
    %v176 = vsel %vm174, %v171, %v173
    %179 = vst [vmem:[#allocation2 + $0x20] sm:$0xff] %v175
    %180 = vst [vmem:[#allocation2 + $0x28] sm:$0xff] %v176
    %181 = vrot.lane.b32.xlu0 %v92, 15
    %v182 = vpop.permute.xlu0 %181
    %v183 = vrot.slane %v182, 7
    %vm184 = vcmask 121856
    %v185 = vsel %vm184, %v183, %v182
    %v187 = vsub.f32 %v92, %v185
    %v188 = vand.u32 2147483647, %v187
    %v189 = vmul.f32 %v188, -8.3
    %v190 = vmul.f32 %v189, 1.442695
    %v191 = vpow.pop %v190
    %v194 = vrot.slane %v88, 7
    %v195 = vsel %vm108, %v87, %v194
    %196 = vrot.lane.b32.xlu0 %v195, 17
    %v197 = vpop.permute.xlu0 %196
    %v198 = vrot.slane %v197, 7
    %v199 = vsel %vm97, %v198, %v197
    %v201 = vmul.f32 %v191, %v199
    %v203 = vperm.slane %v201, 0
    %v204 = vperm.slane %v201, 1
    %v205 = vperm.slane %v201, 2
    %206 = vrot.lane.b32.xlu0 %v203, 113
    %v207 = vpop.permute.xlu0 %206
    %208 = vrot.lane.b32.xlu0 %v204, 113
    %v209 = vpop.permute.xlu0 %208
    %210 = vrot.lane.b32.xlu0 %v205, 113
    %v211 = vpop.permute.xlu0 %210
    %vm212 = vcmask 924672
    %v213 = vsel %vm212, %v207, %v209
    %v214 = vsel %vm212, %v209, %v211
    %v218 = vmul.f32 %v89, %v213
    %v219 = vmul.f32 %v90, %v214
    %v220 = vmul.f32 %v91, %v211
    %224 = vrot.lane.b32.xlu0 %v218, 126
    %v225 = vpop.permute.xlu0 %224
    %226 = vrot.lane.b32.xlu0 %v219, 126
    %v227 = vpop.permute.xlu0 %226
    %228 = vrot.lane.b32.xlu0 %v220, 126
    %v229 = vpop.permute.xlu0 %228
    %vm230 = vcmask 1031168
    %v231 = vsel %vm230, %v225, %v227
    %v232 = vsel %vm230, %v227, %v229
    %235 = vst [vmem:[#allocation2 + $0x40] sm:$0xff] %v231
    %236 = vst [vmem:[#allocation2 + $0x48] sm:$0xff] %v232
    %237 = vrot.lane.b32.xlu0 %v92, 1
    %v238 = vpop.permute.xlu0 %237
    %v239 = vrot.slane %v238, 7
    %vm240 = vcmask 7168
    %v241 = vsel %vm240, %v239, %v238
    %v243 = vsub.f32 %v92, %v241
    %v244 = vand.u32 2147483647, %v243
    %v245 = vmul.f32 %v244, -8.3
    %v246 = vmul.f32 %v245, 1.442695
    %v247 = vpow.pop %v246
    %v248 = vmul.f32 %v247, %v113
    %v250 = vperm.slane %v248, 0
    %v251 = vperm.slane %v248, 1
    %v252 = vperm.slane %v248, 2
    %253 = vrot.lane.b32.xlu0 %v250, 127
    %v254 = vpop.permute.xlu0 %253
    %255 = vrot.lane.b32.xlu0 %v251, 127
    %v256 = vpop.permute.xlu0 %255
    %257 = vrot.lane.b32.xlu0 %v252, 127
    %v258 = vpop.permute.xlu0 %257
    %v259 = vsel %vm174, %v254, %v256
    %v260 = vsel %vm174, %v256, %v258
    %v264 = vmul.f32 %v89, %v259
    %v265 = vmul.f32 %v90, %v260
    %v266 = vmul.f32 %v91, %v258
    %270 = vrot.lane.b32.xlu0 %v264, 112
    %v271 = vpop.permute.xlu0 %270
    %272 = vrot.lane.b32.xlu0 %v265, 112
    %v273 = vpop.permute.xlu0 %272
    %274 = vrot.lane.b32.xlu0 %v266, 112
    %v275 = vpop.permute.xlu0 %274
    %v276 = vsel %vm156, %v271, %v273
    %v277 = vsel %vm156, %v273, %v275
    %280 = vst [vmem:[#allocation2 + $0x60] sm:$0xff] %v276
    %281 = vst [vmem:[#allocation2 + $0x68] sm:$0xff] %v277
    %v282 = vsub.f32 %v92, %v92
    %v283 = vand.u32 2147483647, %v282
    %v284 = vmul.f32 %v283, -8.3
    %v285 = vmul.f32 %v284, 1.442695
    %v286 = vpow.pop %v285
    %v288 = vperm.slane %v286, 0
    %v289 = vperm.slane %v286, 1
    %v290 = vperm.slane %v286, 2
    %v294 = vmul.f32 %v89, %v288
    %v295 = vmul.f32 %v90, %v289
    %v296 = vmul.f32 %v91, %v290
    %300 = vrot.lane.b32.xlu0 %v294, 111
    %v301 = vpop.permute.xlu0 %300
    %302 = vrot.lane.b32.xlu0 %v295, 111
    %v303 = vpop.permute.xlu0 %302
    %304 = vrot.lane.b32.xlu0 %v296, 111
    %v305 = vpop.permute.xlu0 %304
    %v306 = vsel %vm126, %v301, %v303
    %v307 = vsel %vm126, %v303, %v305
    %310 = vst [vmem:[#allocation2 + $0x80] sm:$0xff] %v306
    %311 = vst [vmem:[#allocation2 + $0x88] sm:$0xff] %v307
    %312 = vrot.lane.b32.xlu0 %v92, 127
    %v313 = vpop.permute.xlu0 %312
    %v314 = vrot.slane %v313, 1
    %v315 = vsel %vm174, %v313, %v314
    %v317 = vsub.f32 %v92, %v315
    %v318 = vand.u32 2147483647, %v317
    %v319 = vmul.f32 %v318, -8.3
    %v320 = vmul.f32 %v319, 1.442695
    %v321 = vpow.pop %v320
    %v322 = vmul.f32 %v321, %v199
    %v324 = vperm.slane %v322, 0
    %v325 = vperm.slane %v322, 1
    %v326 = vperm.slane %v322, 2
    %327 = vrot.lane.b32.xlu0 %v324, 1
    %v328 = vpop.permute.xlu0 %327
    %329 = vrot.lane.b32.xlu0 %v325, 1
    %v330 = vpop.permute.xlu0 %329
    %331 = vrot.lane.b32.xlu0 %v326, 1
    %v332 = vpop.permute.xlu0 %331
    %v333 = vsel %vm240, %v328, %v330
    %v334 = vsel %vm240, %v330, %v332
    %v338 = vmul.f32 %v89, %v328
    %v339 = vmul.f32 %v90, %v333
    %v340 = vmul.f32 %v91, %v334
    %344 = vrot.lane.b32.xlu0 %v338, 110
    %v345 = vpop.permute.xlu0 %344
    %346 = vrot.lane.b32.xlu0 %v339, 110
    %v347 = vpop.permute.xlu0 %346
    %348 = vrot.lane.b32.xlu0 %v340, 110
    %v349 = vpop.permute.xlu0 %348
    %vm350 = vcmask 900096
    %v351 = vsel %vm350, %v345, %v347
    %v352 = vsel %vm350, %v347, %v349
    %355 = vst [vmem:[#allocation2 + $0xa0] sm:$0xff] %v351
    %356 = vst [vmem:[#allocation2 + $0xa8] sm:$0xff] %v352
    %357 = vrot.lane.b32.xlu0 %v92, 113
    %v358 = vpop.permute.xlu0 %357
    %v359 = vrot.slane %v358, 1
    %v360 = vsel %vm212, %v358, %v359
    %v362 = vsub.f32 %v92, %v360
    %v363 = vand.u32 2147483647, %v362
    %v364 = vmul.f32 %v363, -8.3
    %v365 = vmul.f32 %v364, 1.442695
    %v366 = vpow.pop %v365
    %v367 = vmul.f32 %v366, %v113
    %v369 = vperm.slane %v367, 0
    %v370 = vperm.slane %v367, 1
    %v371 = vperm.slane %v367, 2
    %372 = vrot.lane.b32.xlu0 %v369, 15
    %v373 = vpop.permute.xlu0 %372
    %374 = vrot.lane.b32.xlu0 %v370, 15
    %v375 = vpop.permute.xlu0 %374
    %376 = vrot.lane.b32.xlu0 %v371, 15
    %v377 = vpop.permute.xlu0 %376
    %v378 = vsel %vm184, %v373, %v375
    %v379 = vsel %vm184, %v375, %v377
    %v383 = vmul.f32 %v89, %v373
    %v384 = vmul.f32 %v90, %v378
    %v385 = vmul.f32 %v91, %v379
    %389 = vrot.lane.b32.xlu0 %v383, 96
    %v390 = vpop.permute.xlu0 %389
    %391 = vrot.lane.b32.xlu0 %v384, 96
    %v392 = vpop.permute.xlu0 %391
    %393 = vrot.lane.b32.xlu0 %v385, 96
    %v394 = vpop.permute.xlu0 %393
    %vm395 = vcmask 785408
    %v396 = vsel %vm395, %v390, %v392
    %v397 = vsel %vm395, %v392, %v394
    %400 = vst [vmem:[#allocation2 + $0xc0] sm:$0xff] %v396
    %401 = vst [vmem:[#allocation2 + $0xc8] sm:$0xff] %v397
    %402 = vrot.lane.b32.xlu0 %v92, 112
    %v403 = vpop.permute.xlu0 %402
    %v404 = vrot.slane %v403, 1
    %v405 = vsel %vm156, %v403, %v404
    %v407 = vsub.f32 %v92, %v405
    %v408 = vand.u32 2147483647, %v407
    %v409 = vmul.f32 %v408, -8.3
    %v410 = vmul.f32 %v409, 1.442695
    %v411 = vpow.pop %v410
    %v413 = vperm.slane %v411, 0
    %v414 = vperm.slane %v411, 1
    %v415 = vperm.slane %v411, 2
    %416 = vrot.lane.b32.xlu0 %v413, 16
    %v417 = vpop.permute.xlu0 %416
    %418 = vrot.lane.b32.xlu0 %v414, 16
    %v419 = vpop.permute.xlu0 %418
    %420 = vrot.lane.b32.xlu0 %v415, 16
    %v421 = vpop.permute.xlu0 %420
    %v422 = vsel %vm138, %v417, %v419
    %v423 = vsel %vm138, %v419, %v421
    %v427 = vmul.f32 %v89, %v417
    %v428 = vmul.f32 %v90, %v422
    %v429 = vmul.f32 %v91, %v423
    %433 = vrot.lane.b32.xlu0 %v427, 95
    %v434 = vpop.permute.xlu0 %433
    %435 = vrot.lane.b32.xlu0 %v428, 95
    %v436 = vpop.permute.xlu0 %435
    %437 = vrot.lane.b32.xlu0 %v429, 95
    %v438 = vpop.permute.xlu0 %437
    %vm439 = vcmask 777216
    %v440 = vsel %vm439, %v434, %v436
    %v441 = vsel %vm439, %v436, %v438
    %444 = vst [vmem:[#allocation2 + $0xe0] sm:$0xff] %v440
    %445 = vst [vmem:[#allocation2 + $0xe8] sm:$0xff] %v441
    %446 = vrot.lane.b32.xlu0 %v92, 111
    %v447 = vpop.permute.xlu0 %446
    %v448 = vrot.slane %v447, 1
    %v449 = vsel %vm126, %v447, %v448
    %v451 = vsub.f32 %v92, %v449
    %v452 = vand.u32 2147483647, %v451
    %v453 = vmul.f32 %v452, -8.3
    %v454 = vmul.f32 %v453, 1.442695
    %v455 = vpow.pop %v454
    %v456 = vmul.f32 %v455, %v199
    %v458 = vperm.slane %v456, 0
    %v459 = vperm.slane %v456, 1
    %v460 = vperm.slane %v456, 2
    %461 = vrot.lane.b32.xlu0 %v458, 17
    %v462 = vpop.permute.xlu0 %461
    %463 = vrot.lane.b32.xlu0 %v459, 17
    %v464 = vpop.permute.xlu0 %463
    %465 = vrot.lane.b32.xlu0 %v460, 17
    %v466 = vpop.permute.xlu0 %465
    %v467 = vsel %vm97, %v462, %v464
    %v468 = vsel %vm97, %v464, %v466
    %v472 = vmul.f32 %v89, %v462
    %v473 = vmul.f32 %v90, %v467
    %v474 = vmul.f32 %v91, %v468
    %478 = vrot.lane.b32.xlu0 %v472, 94
    %v479 = vpop.permute.xlu0 %478
    %480 = vrot.lane.b32.xlu0 %v473, 94
    %v481 = vpop.permute.xlu0 %480
    %482 = vrot.lane.b32.xlu0 %v474, 94
    %v483 = vpop.permute.xlu0 %482
    %vm484 = vcmask 769024
    %v485 = vsel %vm484, %v479, %v481
    %v486 = vsel %vm484, %v481, %v483
    %489 = vst [vmem:[#allocation2 + $0x100] sm:$0xff] %v485
    %490 = vst [vmem:[#allocation2 + $0x108] sm:$0xff] %v486
    %s491 = scalar_lea.vmem [#allocation3], 24
    %v492 = vld [vmem:[%s491] sm:$0xff]
    %v493 = vld [vmem:[%s491 + $0x8] sm:$0xff]
    %v494 = vld [vmem:[%s491 + $0x10] sm:$0xff]
    %s495 = scalar_lea.vmem [#allocation6], 3
    %v496 = vld [vmem:[%s495] sm:$0x7]
    %498 = vrot.lane.b32.xlu0 %v496, 17
    %v499 = vpop.permute.xlu0 %498
    %v500 = vrot.slane %v499, 7
    %v501 = vsel %vm97, %v500, %v499
    %v503 = vsub.f32 %v496, %v501
    %v504 = vand.u32 2147483647, %v503
    %v505 = vmul.f32 %v504, -8.3
    %v506 = vmul.f32 %v505, 1.442695
    %v507 = vpow.pop %v506
    %v508 = vmul.f32 %v507, %v113
    %v510 = vperm.slane %v508, 0
    %v511 = vperm.slane %v508, 1
    %v512 = vperm.slane %v508, 2
    %513 = vrot.lane.b32.xlu0 %v510, 111
    %v514 = vpop.permute.xlu0 %513
    %515 = vrot.lane.b32.xlu0 %v511, 111
    %v516 = vpop.permute.xlu0 %515
    %517 = vrot.lane.b32.xlu0 %v512, 111
    %v518 = vpop.permute.xlu0 %517
    %v519 = vsel %vm126, %v514, %v516
    %v520 = vsel %vm126, %v516, %v518
    %v523 = vmul.f32 %v492, %v519
    %v524 = vmul.f32 %v493, %v520
    %525 = vst [vmem:[#allocation2 + $0x10] sm:$0xff] %v523
    %526 = vst [vmem:[#allocation2 + $0x18] sm:$0xff] %v524
    %527 = vrot.lane.b32.xlu0 %v496, 16
    %v528 = vpop.permute.xlu0 %527
    %v529 = vrot.slane %v528, 7
    %v530 = vsel %vm138, %v529, %v528
    %v532 = vsub.f32 %v496, %v530
    %v533 = vand.u32 2147483647, %v532
    %v534 = vmul.f32 %v533, -8.3
    %v535 = vmul.f32 %v534, 1.442695
    %v536 = vpow.pop %v535
    %v538 = vperm.slane %v536, 0
    %v539 = vperm.slane %v536, 1
    %v540 = vperm.slane %v536, 2
    %541 = vrot.lane.b32.xlu0 %v538, 112
    %v542 = vpop.permute.xlu0 %541
    %543 = vrot.lane.b32.xlu0 %v539, 112
    %v544 = vpop.permute.xlu0 %543
    %545 = vrot.lane.b32.xlu0 %v540, 112
    %v546 = vpop.permute.xlu0 %545
    %v547 = vsel %vm156, %v542, %v544
    %v548 = vsel %vm156, %v544, %v546
    %v552 = vmul.f32 %v492, %v547
    %v553 = vmul.f32 %v493, %v548
    %v554 = vmul.f32 %v494, %v546
    %558 = vrot.lane.b32.xlu0 %v552, 127
    %v559 = vpop.permute.xlu0 %558
    %560 = vrot.lane.b32.xlu0 %v553, 127
    %v561 = vpop.permute.xlu0 %560
    %562 = vrot.lane.b32.xlu0 %v554, 127
    %v563 = vpop.permute.xlu0 %562
    %v564 = vsel %vm174, %v559, %v561
    %v565 = vsel %vm174, %v561, %v563
    %568 = vst [vmem:[#allocation2 + $0x30] sm:$0xff] %v564
    %569 = vst [vmem:[#allocation2 + $0x38] sm:$0xff] %v565
    %570 = vrot.lane.b32.xlu0 %v496, 15
    %v571 = vpop.permute.xlu0 %570
    %v572 = vrot.slane %v571, 7
    %v573 = vsel %vm184, %v572, %v571
    %v575 = vsub.f32 %v496, %v573
    %v576 = vand.u32 2147483647, %v575
    %v577 = vmul.f32 %v576, -8.3
    %v578 = vmul.f32 %v577, 1.442695
    %v579 = vpow.pop %v578
    %v580 = vmul.f32 %v579, %v199
    %v582 = vperm.slane %v580, 0
    %v583 = vperm.slane %v580, 1
    %v584 = vperm.slane %v580, 2
    %585 = vrot.lane.b32.xlu0 %v582, 113
    %v586 = vpop.permute.xlu0 %585
    %587 = vrot.lane.b32.xlu0 %v583, 113
    %v588 = vpop.permute.xlu0 %587
    %589 = vrot.lane.b32.xlu0 %v584, 113
    %v590 = vpop.permute.xlu0 %589
    %v591 = vsel %vm212, %v586, %v588
    %v592 = vsel %vm212, %v588, %v590
    %v596 = vmul.f32 %v492, %v591
    %v597 = vmul.f32 %v493, %v592
    %v598 = vmul.f32 %v494, %v590
    %602 = vrot.lane.b32.xlu0 %v596, 126
    %v603 = vpop.permute.xlu0 %602
    %604 = vrot.lane.b32.xlu0 %v597, 126
    %v605 = vpop.permute.xlu0 %604
    %606 = vrot.lane.b32.xlu0 %v598, 126
    %v607 = vpop.permute.xlu0 %606
    %v608 = vsel %vm230, %v603, %v605
    %v609 = vsel %vm230, %v605, %v607
    %612 = vst [vmem:[#allocation2 + $0x50] sm:$0xff] %v608
    %613 = vst [vmem:[#allocation2 + $0x58] sm:$0xff] %v609
    %614 = vrot.lane.b32.xlu0 %v496, 1
    %v615 = vpop.permute.xlu0 %614
    %v616 = vrot.slane %v615, 7
    %v617 = vsel %vm240, %v616, %v615
    %v619 = vsub.f32 %v496, %v617
    %v620 = vand.u32 2147483647, %v619
    %v621 = vmul.f32 %v620, -8.3
    %v622 = vmul.f32 %v621, 1.442695
    %v623 = vpow.pop %v622
    %v624 = vmul.f32 %v623, %v113
    %v626 = vperm.slane %v624, 0
    %v627 = vperm.slane %v624, 1
    %v628 = vperm.slane %v624, 2
    %629 = vrot.lane.b32.xlu0 %v626, 127
    %v630 = vpop.permute.xlu0 %629
    %631 = vrot.lane.b32.xlu0 %v627, 127
    %v632 = vpop.permute.xlu0 %631
    %633 = vrot.lane.b32.xlu0 %v628, 127
    %v634 = vpop.permute.xlu0 %633
    %v635 = vsel %vm174, %v630, %v632
    %v636 = vsel %vm174, %v632, %v634
    %v640 = vmul.f32 %v492, %v635
    %v641 = vmul.f32 %v493, %v636
    %v642 = vmul.f32 %v494, %v634
    %646 = vrot.lane.b32.xlu0 %v640, 112
    %v647 = vpop.permute.xlu0 %646
    %648 = vrot.lane.b32.xlu0 %v641, 112
    %v649 = vpop.permute.xlu0 %648
    %650 = vrot.lane.b32.xlu0 %v642, 112
    %v651 = vpop.permute.xlu0 %650
    %v652 = vsel %vm156, %v647, %v649
    %v653 = vsel %vm156, %v649, %v651
    %656 = vst [vmem:[#allocation2 + $0x70] sm:$0xff] %v652
    %657 = vst [vmem:[#allocation2 + $0x78] sm:$0xff] %v653
    %v658 = vsub.f32 %v496, %v496
    %v659 = vand.u32 2147483647, %v658
    %v660 = vmul.f32 %v659, -8.3
    %v661 = vmul.f32 %v660, 1.442695
    %v662 = vpow.pop %v661
    %v664 = vperm.slane %v662, 0
    %v665 = vperm.slane %v662, 1
    %v666 = vperm.slane %v662, 2
    %v670 = vmul.f32 %v492, %v664
    %v671 = vmul.f32 %v493, %v665
    %v672 = vmul.f32 %v494, %v666
    %676 = vrot.lane.b32.xlu0 %v670, 111
    %v677 = vpop.permute.xlu0 %676
    %678 = vrot.lane.b32.xlu0 %v671, 111
    %v679 = vpop.permute.xlu0 %678
    %680 = vrot.lane.b32.xlu0 %v672, 111
    %v681 = vpop.permute.xlu0 %680
    %v682 = vsel %vm126, %v677, %v679
    %v683 = vsel %vm126, %v679, %v681
    %686 = vst [vmem:[#allocation2 + $0x90] sm:$0xff] %v682
    %687 = vst [vmem:[#allocation2 + $0x98] sm:$0xff] %v683
    %688 = vrot.lane.b32.xlu0 %v496, 127
    %v689 = vpop.permute.xlu0 %688
    %v690 = vrot.slane %v689, 1
    %v691 = vsel %vm174, %v689, %v690
    %v693 = vsub.f32 %v496, %v691
    %v694 = vand.u32 2147483647, %v693
    %v695 = vmul.f32 %v694, -8.3
    %v696 = vmul.f32 %v695, 1.442695
    %v697 = vpow.pop %v696
    %v698 = vmul.f32 %v697, %v199
    %v700 = vperm.slane %v698, 0
    %v701 = vperm.slane %v698, 1
    %v702 = vperm.slane %v698, 2
    %703 = vrot.lane.b32.xlu0 %v700, 1
    %v704 = vpop.permute.xlu0 %703
    %705 = vrot.lane.b32.xlu0 %v701, 1
    %v706 = vpop.permute.xlu0 %705
    %707 = vrot.lane.b32.xlu0 %v702, 1
    %v708 = vpop.permute.xlu0 %707
    %v709 = vsel %vm240, %v704, %v706
    %v710 = vsel %vm240, %v706, %v708
    %v714 = vmul.f32 %v492, %v704
    %v715 = vmul.f32 %v493, %v709
    %v716 = vmul.f32 %v494, %v710
    %720 = vrot.lane.b32.xlu0 %v714, 110
    %v721 = vpop.permute.xlu0 %720
    %722 = vrot.lane.b32.xlu0 %v715, 110
    %v723 = vpop.permute.xlu0 %722
    %724 = vrot.lane.b32.xlu0 %v716, 110
    %v725 = vpop.permute.xlu0 %724
    %v726 = vsel %vm350, %v721, %v723
    %v727 = vsel %vm350, %v723, %v725
    %730 = vst [vmem:[#allocation2 + $0xb0] sm:$0xff] %v726
    %731 = vst [vmem:[#allocation2 + $0xb8] sm:$0xff] %v727
    %732 = vrot.lane.b32.xlu0 %v496, 113
    %v733 = vpop.permute.xlu0 %732
    %v734 = vrot.slane %v733, 1
    %v735 = vsel %vm212, %v733, %v734
    %v737 = vsub.f32 %v496, %v735
    %v738 = vand.u32 2147483647, %v737
    %v739 = vmul.f32 %v738, -8.3
    %v740 = vmul.f32 %v739, 1.442695
    %v741 = vpow.pop %v740
    %v742 = vmul.f32 %v741, %v113
    %v744 = vperm.slane %v742, 0
    %v745 = vperm.slane %v742, 1
    %v746 = vperm.slane %v742, 2
    %747 = vrot.lane.b32.xlu0 %v744, 15
    %v748 = vpop.permute.xlu0 %747
    %749 = vrot.lane.b32.xlu0 %v745, 15
    %v750 = vpop.permute.xlu0 %749
    %751 = vrot.lane.b32.xlu0 %v746, 15
    %v752 = vpop.permute.xlu0 %751
    %v753 = vsel %vm184, %v748, %v750
    %v754 = vsel %vm184, %v750, %v752
    %v758 = vmul.f32 %v492, %v748
    %v759 = vmul.f32 %v493, %v753
    %v760 = vmul.f32 %v494, %v754
    %764 = vrot.lane.b32.xlu0 %v758, 96
    %v765 = vpop.permute.xlu0 %764
    %766 = vrot.lane.b32.xlu0 %v759, 96
    %v767 = vpop.permute.xlu0 %766
    %768 = vrot.lane.b32.xlu0 %v760, 96
    %v769 = vpop.permute.xlu0 %768
    %v770 = vsel %vm395, %v765, %v767
    %v771 = vsel %vm395, %v767, %v769
    %774 = vst [vmem:[#allocation2 + $0xd0] sm:$0xff] %v770
    %775 = vst [vmem:[#allocation2 + $0xd8] sm:$0xff] %v771
    %776 = vrot.lane.b32.xlu0 %v496, 112
    %v777 = vpop.permute.xlu0 %776
    %v778 = vrot.slane %v777, 1
    %v779 = vsel %vm156, %v777, %v778
    %v781 = vsub.f32 %v496, %v779
    %v782 = vand.u32 2147483647, %v781
    %v783 = vmul.f32 %v782, -8.3
    %v784 = vmul.f32 %v783, 1.442695
    %v785 = vpow.pop %v784
    %v787 = vperm.slane %v785, 0
    %v788 = vperm.slane %v785, 1
    %v789 = vperm.slane %v785, 2
    %790 = vrot.lane.b32.xlu0 %v787, 16
    %v791 = vpop.permute.xlu0 %790
    %792 = vrot.lane.b32.xlu0 %v788, 16
    %v793 = vpop.permute.xlu0 %792
    %794 = vrot.lane.b32.xlu0 %v789, 16
    %v795 = vpop.permute.xlu0 %794
    %v796 = vsel %vm138, %v791, %v793
    %v797 = vsel %vm138, %v793, %v795
    %v801 = vmul.f32 %v492, %v791
    %v802 = vmul.f32 %v493, %v796
    %v803 = vmul.f32 %v494, %v797
    %807 = vrot.lane.b32.xlu0 %v801, 95
    %v808 = vpop.permute.xlu0 %807
    %809 = vrot.lane.b32.xlu0 %v802, 95
    %v810 = vpop.permute.xlu0 %809
    %811 = vrot.lane.b32.xlu0 %v803, 95
    %v812 = vpop.permute.xlu0 %811
    %v813 = vsel %vm439, %v808, %v810
    %v814 = vsel %vm439, %v810, %v812
    %817 = vst [vmem:[#allocation2 + $0xf0] sm:$0xff] %v813
    %818 = vst [vmem:[#allocation2 + $0xf8] sm:$0xff] %v814
    %819 = vrot.lane.b32.xlu0 %v496, 111
    %v820 = vpop.permute.xlu0 %819
    %v821 = vrot.slane %v820, 1
    %v822 = vsel %vm126, %v820, %v821
    %v824 = vsub.f32 %v496, %v822
    %v825 = vand.u32 2147483647, %v824
    %v826 = vmul.f32 %v825, -8.3
    %v827 = vmul.f32 %v826, 1.442695
    %v828 = vpow.pop %v827
    %v829 = vmul.f32 %v828, %v199
    %v831 = vperm.slane %v829, 0
    %v832 = vperm.slane %v829, 1
    %v833 = vperm.slane %v829, 2
    %834 = vrot.lane.b32.xlu0 %v831, 17
    %v835 = vpop.permute.xlu0 %834
    %836 = vrot.lane.b32.xlu0 %v832, 17
    %v837 = vpop.permute.xlu0 %836
    %838 = vrot.lane.b32.xlu0 %v833, 17
    %v839 = vpop.permute.xlu0 %838
    %v840 = vsel %vm97, %v835, %v837
    %v841 = vsel %vm97, %v837, %v839
    %v845 = vmul.f32 %v492, %v835
    %v846 = vmul.f32 %v493, %v840
    %v847 = vmul.f32 %v494, %v841
    %851 = vrot.lane.b32.xlu0 %v845, 94
    %v852 = vpop.permute.xlu0 %851
    %853 = vrot.lane.b32.xlu0 %v846, 94
    %v854 = vpop.permute.xlu0 %853
    %855 = vrot.lane.b32.xlu0 %v847, 94
    %v856 = vpop.permute.xlu0 %855
    %v857 = vsel %vm484, %v852, %v854
    %v858 = vsel %vm484, %v854, %v856
    %861 = vst [vmem:[#allocation2 + $0x110] sm:$0xff] %v857
    %862 = vst [vmem:[#allocation2 + $0x118] sm:$0xff] %v858
    %v863 = vld [vmem:[%s2] sm:$0xff]
    %v864 = vld [vmem:[#allocation2] sm:$0xff]
    %v865 = vld [vmem:[#allocation2 + $0x8] sm:$0xff]
    %v866 = vld [vmem:[#allocation2 + $0x10] sm:$0xff]
    %v867 = vld [vmem:[#allocation2 + $0x18] sm:$0xff]
    %v868 = vld [vmem:[#allocation2 + $0x20] sm:$0xff]
    %v869 = vld [vmem:[#allocation2 + $0x28] sm:$0xff]
    %v870 = vld [vmem:[#allocation2 + $0x30] sm:$0xff]
    %v871 = vld [vmem:[#allocation2 + $0x38] sm:$0xff]
    %v872 = vld [vmem:[#allocation2 + $0x40] sm:$0xff]
    %v873 = vld [vmem:[#allocation2 + $0x48] sm:$0xff]
    %v874 = vld [vmem:[#allocation2 + $0x50] sm:$0xff]
    %v875 = vld [vmem:[#allocation2 + $0x58] sm:$0xff]
    %v876 = vld [vmem:[#allocation2 + $0x60] sm:$0xff]
    %v877 = vld [vmem:[#allocation2 + $0x68] sm:$0xff]
    %v878 = vld [vmem:[#allocation2 + $0x70] sm:$0xff]
    %v879 = vld [vmem:[#allocation2 + $0x78] sm:$0xff]
    %v880 = vld [vmem:[#allocation2 + $0x80] sm:$0xff]
    %v881 = vld [vmem:[#allocation2 + $0x88] sm:$0xff]
    %v882 = vld [vmem:[#allocation2 + $0x90] sm:$0xff]
    %v883 = vld [vmem:[#allocation2 + $0x98] sm:$0xff]
    %v884 = vld [vmem:[#allocation2 + $0xa0] sm:$0xff]
    %v885 = vld [vmem:[#allocation2 + $0xa8] sm:$0xff]
    %v886 = vld [vmem:[#allocation2 + $0xb0] sm:$0xff]
    %v887 = vld [vmem:[#allocation2 + $0xb8] sm:$0xff]
    %v888 = vld [vmem:[#allocation2 + $0xc0] sm:$0xff]
    %v889 = vld [vmem:[#allocation2 + $0xc8] sm:$0xff]
    %v890 = vld [vmem:[#allocation2 + $0xd0] sm:$0xff]
    %v891 = vld [vmem:[#allocation2 + $0xd8] sm:$0xff]
    %v892 = vld [vmem:[#allocation2 + $0xe0] sm:$0xff]
    %v893 = vld [vmem:[#allocation2 + $0xe8] sm:$0xff]
    %v894 = vld [vmem:[#allocation2 + $0xf0] sm:$0xff]
    %v895 = vld [vmem:[#allocation2 + $0xf8] sm:$0xff]
    %v896 = vld [vmem:[#allocation2 + $0x100] sm:$0xff]
    %v897 = vld [vmem:[#allocation2 + $0x108] sm:$0xff]
    %v898 = vld [vmem:[#allocation2 + $0x110] sm:$0xff]
    %v899 = vld [vmem:[#allocation2 + $0x118] sm:$0xff]
    %v900 = vld [vmem:[%s3] sm:$0xff]
    %902 = vset.pattern.permute.xlu0 0
    %903 = vperm.xlu0 %902, %v900
    %v904 = vpop.permute.xlu0 %903
    %vm906 = vcmask 588800
    %v908 = vsel %vm906, %v863, 0
    %910 = vmatpush.msra.mxu0 0.0
    %911 = vmatpush.msra.mxu0 0.0
    %912 = vmatpush.msra.mxu0 0.0
    %913 = vmatpush.msra.mxu0 0.0
    %914 = vmatpush.msra.mxu0 0.0
    %915 = vmatpush.msra.mxu0 0.0
    %916 = vmatpush.msra.mxu0 0.0
    %917 = vmatpush.msra.mxu0 %v896
    %918 = vmatpush.msra.mxu0 %v892
    %919 = vmatpush.msra.mxu0 %v888
    %920 = vmatpush.msra.mxu0 %v884
    %921 = vmatpush.msra.mxu0 %v880
    %922 = vmatpush.msra.mxu0 %v876
    %923 = vmatpush.msra.mxu0 %v872
    %924 = vmatpush.msra.mxu0 %v868
    %925 = vmatpush.msra.mxu0 %v864
    %926 = vmatmul.f32.gmra.mxu0 %v908
    %v927 = vpop.f32.mrf.mxu0
    %v928 = vadd.f32 %v904, %v927
    %929 = vdwg.mxu0
    %930 = vmatpush.msra.mxu0 0.0
    %931 = vmatpush.msra.mxu0 0.0
    %932 = vmatpush.msra.mxu0 0.0
    %933 = vmatpush.msra.mxu0 0.0
    %934 = vmatpush.msra.mxu0 0.0
    %935 = vmatpush.msra.mxu0 0.0
    %936 = vmatpush.msra.mxu0 0.0
    %937 = vmatpush.msra.mxu0 %v897
    %938 = vmatpush.msra.mxu0 %v893
    %939 = vmatpush.msra.mxu0 %v889
    %940 = vmatpush.msra.mxu0 %v885
    %941 = vmatpush.msra.mxu0 %v881
    %942 = vmatpush.msra.mxu0 %v877
    %943 = vmatpush.msra.mxu0 %v873
    %944 = vmatpush.msra.mxu0 %v869
    %945 = vmatpush.msra.mxu0 %v865
    %946 = vmatmul.f32.gmra.mxu0 %v908
    %v947 = vpop.f32.mrf.mxu0
    %v948 = vadd.f32 %v904, %v947
    %949 = vdwg.mxu0
    %950 = vmatpush.msra.mxu0 0.0
    %951 = vmatpush.msra.mxu0 0.0
    %952 = vmatpush.msra.mxu0 0.0
    %953 = vmatpush.msra.mxu0 0.0
    %954 = vmatpush.msra.mxu0 0.0
    %955 = vmatpush.msra.mxu0 0.0
    %956 = vmatpush.msra.mxu0 0.0
    %957 = vmatpush.msra.mxu0 %v898
    %958 = vmatpush.msra.mxu0 %v894
    %959 = vmatpush.msra.mxu0 %v890
    %960 = vmatpush.msra.mxu0 %v886
    %961 = vmatpush.msra.mxu0 %v882
    %962 = vmatpush.msra.mxu0 %v878
    %963 = vmatpush.msra.mxu0 %v874
    %964 = vmatpush.msra.mxu0 %v870
    %965 = vmatpush.msra.mxu0 %v866
    %966 = vmatmul.f32.gmra.mxu0 %v908
    %v967 = vpop.f32.mrf.mxu0
    %v968 = vadd.f32 %v904, %v967
    %969 = vdwg.mxu0
    %970 = vmatpush.msra.mxu0 0.0
    %971 = vmatpush.msra.mxu0 0.0
    %972 = vmatpush.msra.mxu0 0.0
    %973 = vmatpush.msra.mxu0 0.0
    %974 = vmatpush.msra.mxu0 0.0
    %975 = vmatpush.msra.mxu0 0.0
    %976 = vmatpush.msra.mxu0 0.0
    %977 = vmatpush.msra.mxu0 %v899
    %978 = vmatpush.msra.mxu0 %v895
    %979 = vmatpush.msra.mxu0 %v891
    %980 = vmatpush.msra.mxu0 %v887
    %981 = vmatpush.msra.mxu0 %v883
    %982 = vmatpush.msra.mxu0 %v879
    %983 = vmatpush.msra.mxu0 %v875
    %984 = vmatpush.msra.mxu0 %v871
    %985 = vmatpush.msra.mxu0 %v867
    %986 = vmatmul.f32.gmra.mxu0 %v908
    %v987 = vpop.f32.mrf.mxu0
    %v988 = vadd.f32 %v904, %v987
    %989 = vdwg.mxu0
    %v990 = vmax.f32 %v928, 0.0
    %v991 = vmax.f32 %v948, 0.0
    %v992 = vmax.f32 %v968, 0.0
    %v993 = vmax.f32 %v988, 0.0
    %994 = vst [vmem:[#allocation8] sm:$0xff] %v990
    %995 = vst [vmem:[#allocation8 + $0x8] sm:$0xff] %v991
    %s996 = scalar_lea.vmem [#allocation8], 16
    %997 = vst [vmem:[%s996] sm:$0xff] %v992
    %998 = vst [vmem:[%s996 + $0x8] sm:$0xff] %v993
    // Predicated region
    $region26: #{tpu_custom_call.1} parent=1 // pred_check
      _
    $region27: #{tpu_custom_call.1} parent=1 // pred_check_branch
      %1000 = sbr.rel (0) target = $region29
    $region28: #{tpu_custom_call.1} parent=1 // pred_region
      %1002 = vsyncadd [#allocation5], 0
      %s1003 = sshll.u32 [#allocation8], 4
      %s1004 = int_to_ptr.vmem [resolvable:$true] %s1003
      %s1005 = sshll.u32 %s4, 4
      %s1006 = int_to_ptr.hbm [resolvable:$true] %s1005
      %1011 = dma.vmem_to_hbm [thread:$0]  %s1004, 512, %s1006, [#allocation5], 256, 256, 16
    $region29: #{tpu_custom_call.1} parent=1 // pred_fallthru
      _
    // Predicated region
    $region30: #{tpu_custom_call.1} parent=1 // pred_check
      _
    $region31: #{tpu_custom_call.1} parent=1 // pred_check_branch
      %1013 = sbr.rel (0) target = $region33
    $region32: #{tpu_custom_call.1} parent=1 // pred_region
      %1015 = dma.done [#allocation5], 512
    $region33: #{tpu_custom_call.1} parent=1 // pred_fallthru
      _
    %1016 = vsyncpa [#allocation4], 1
    %1017 = vsyncpa [#allocation7], 1
    %1018 = vsyncpa [#allocation5], 1

</llo_original>
